<compile_context>
chip_gen: v7x
topology: tpu7x:2x2x1
jax: 0.10.0
libtpu: 0.0.40
codegen_flags: <defaults>
</compile_context>

<pallas_src>
import functools

import jax
import jax.numpy as jnp
from jax import lax
from jax.experimental import pallas as pl
from jax.experimental.pallas import tpu as pltpu


# --------------------------------------------------------------------------
# Kernels
# --------------------------------------------------------------------------
def conv_stats_kernel(w_ref, p_ref, y_ref, sum_ref, ssq_ref):
    """Conv as a single lane-dense matmul + per-channel sum / sumsq accumulation.

    w_ref:   (Cout, K)        packed conv weight (K = KH*KW*Cin), resident
    p_ref:   (1, K, THW)      im2col patch tile for image n, HW-tile t
    y_ref:   (1, Cout, THW)   conv output tile (pre-BN)
    sum_ref: (1, Cout, 1)     per-image per-channel sum   (resident over t)
    ssq_ref: (1, Cout, 1)     per-image per-channel sumsq (resident over t)
    """
    t = pl.program_id(1)

    # Single K-deep matmul per block; accumulate in vregs, f32.
    y = jnp.dot(w_ref[...], p_ref[0], preferred_element_type=jnp.float32)

    # Lane-dense store (Cout on sublanes, THW on lanes).
    y_ref[0] = y.astype(y_ref.dtype)

    # Global-stat accumulators: zero on the first HW tile of each image.
    @pl.when(t == 0)
    def _():
        sum_ref[...] = jnp.zeros_like(sum_ref)
        ssq_ref[...] = jnp.zeros_like(ssq_ref)

    sum_ref[...] += jnp.sum(y, axis=1, keepdims=True)[None]
    ssq_ref[...] += jnp.sum(y * y, axis=1, keepdims=True)[None]


def bn_apply_kernel(scale_ref, shift_ref, y_ref, o_ref):
    """Second pass: y * scale + shift (per-channel scale/shift pre-folded)."""
    o_ref[0] = (y_ref[0] * scale_ref[...] + shift_ref[...]).astype(o_ref.dtype)


# --------------------------------------------------------------------------
# Wrapper
# --------------------------------------------------------------------------
def _im2col(x_nchw, KH, KW, padding):
    """NCHW -> (N, K, H*W) im2col with tap ordering (kh, kw, cin)."""
    N, Cin, H, W = x_nchw.shape
    x_nhwc = jnp.transpose(x_nchw, (0, 2, 3, 1))
    x_pad = jnp.pad(x_nhwc, ((0, 0), (padding, padding), (padding, padding), (0, 0)))
    taps = []
    for kh in range(KH):
        for kw in range(KW):
            taps.append(x_pad[:, kh:kh + H, kw:kw + W, :])       # (N, H, W, Cin)
    patches = jnp.concatenate(taps, axis=-1)                      # (N, H, W, KH*KW*Cin)
    patches = patches.reshape(N, H * W, KH * KW * Cin)
    return jnp.transpose(patches, (0, 2, 1))                      # (N, K, H*W)


def _pick_hw_tile(hw, max_lanes=2048):
    """Largest multiple-of-128 divisor of hw (capped); fall back to full hw."""
    best = None
    t = 128
    while t <= min(hw, max_lanes):
        if hw % t == 0:
            best = t
        t += 128
    return best if best is not None else hw


def conv_bn(x_nchw, w_oihw, gamma, beta, *, padding=1, eps=1e-5, tile_hw=None):
    """NCHW in / NCHW out; stride=1, dilation=1, groups=1, bias=False, BN train-mode."""
    N, Cin, H, W = x_nchw.shape
    Cout, Cin_w, KH, KW = w_oihw.shape
    assert Cin == Cin_w
    K = KH * KW * Cin
    HW = H * W
    M = N * HW

    # Glue: im2col (lane-dense RHS) and weight packing (Cout, K) with matching
    # (kh, kw, cin) ordering.
    # TODO(synk): at very large H*W the 9x im2col expansion should be replaced
    # by in-kernel halo DMA of the padded input; fine at these sizes.
    patches = _im2col(x_nchw, KH, KW, padding)                    # (N, K, HW)
    w_packed = jnp.transpose(w_oihw, (0, 2, 3, 1)).reshape(Cout, K)

    THW = tile_hw if tile_hw is not None else _pick_hw_tile(HW)
    assert HW % THW == 0
    grid = (N, HW // THW)

    cparams_stats = pltpu.CompilerParams(
        dimension_semantics=("parallel", "arbitrary"),
        vmem_limit_bytes=48 * 1024 * 1024,
    )
    cparams_apply = pltpu.CompilerParams(
        dimension_semantics=("parallel", "parallel"),
        vmem_limit_bytes=48 * 1024 * 1024,
    )

    # Pass 1: conv (pre-BN) + per-image per-channel sum / sumsq.
    y, csum, cssq = pl.pallas_call(
        conv_stats_kernel,
        out_shape=(
            jax.ShapeDtypeStruct((N, Cout, HW), jnp.float32),
            jax.ShapeDtypeStruct((N, Cout, 1), jnp.float32),
            jax.ShapeDtypeStruct((N, Cout, 1), jnp.float32),
        ),
        grid=grid,
        in_specs=[
            pl.BlockSpec((Cout, K), lambda n, t: (0, 0)),         # weight, resident
            pl.BlockSpec((1, K, THW), lambda n, t: (n, 0, t)),    # im2col tile
        ],
        out_specs=(
            pl.BlockSpec((1, Cout, THW), lambda n, t: (n, 0, t)),
            pl.BlockSpec((1, Cout, 1), lambda n, t: (n, 0, 0)),   # accumulator
            pl.BlockSpec((1, Cout, 1), lambda n, t: (n, 0, 0)),   # accumulator
        ),
        compiler_params=cparams_stats,
    )(w_packed, patches)

    # Glue: fold global batch statistics into per-channel scale / shift.
    total = jnp.sum(csum, axis=(0, 2))                            # (Cout,)
    total_sq = jnp.sum(cssq, axis=(0, 2))                         # (Cout,)
    mean = total / M
    var = jnp.maximum(total_sq / M - mean * mean, 0.0)
    inv_std = lax.rsqrt(var + eps)
    scale = (gamma * inv_std).astype(jnp.float32)
    shift = (beta - mean * scale).astype(jnp.float32)
    scale = scale.reshape(Cout, 1)
    shift = shift.reshape(Cout, 1)

    # Pass 2: lane-dense FMA normalization.
    out = pl.pallas_call(
        bn_apply_kernel,
        out_shape=jax.ShapeDtypeStruct((N, Cout, HW), jnp.float32),
        grid=grid,
        in_specs=[
            pl.BlockSpec((Cout, 1), lambda n, t: (0, 0)),
            pl.BlockSpec((Cout, 1), lambda n, t: (0, 0)),
            pl.BlockSpec((1, Cout, THW), lambda n, t: (n, 0, t)),
        ],
        out_specs=pl.BlockSpec((1, Cout, THW), lambda n, t: (n, 0, t)),
        compiler_params=cparams_apply,
    )(scale, shift, y)

    # (N, Cout, HW) -> NCHW is a pure reshape (no transpose needed).
    return out.reshape(N, Cout, H, W)


# --------------------------------------------------------------------------
# Pure-JAX reference
# --------------------------------------------------------------------------
def reference_conv_bn(x_nchw, w_oihw, gamma, beta, *, padding=1, eps=1e-5):
    y = lax.conv_general_dilated(
        x_nchw, w_oihw, window_strides=(1, 1),
        padding=[(padding, padding), (padding, padding)],
        dimension_numbers=("NCHW", "OIHW", "NCHW"),
        precision=lax.Precision.HIGHEST)
    mean = jnp.mean(y, axis=(0, 2, 3), keepdims=True)
    var = jnp.mean((y - mean) ** 2, axis=(0, 2, 3), keepdims=True)
    y = (y - mean) * lax.rsqrt(var + eps)
    return y * gamma.reshape(1, -1, 1, 1) + beta.reshape(1, -1, 1, 1)


if __name__ == "__main__":
    # module config: conv(in_channels=4, out_channels=8, kernel_size=3,
    #                     stride=1, padding=1, bias=False, bn=True)
    N, Cin, H, W = 2, 4, 16, 16
    Cout, KH, KW = 8, 3, 3

    key = jax.random.PRNGKey(0)
    kx, kw_key = jax.random.split(key)

    x = jax.random.normal(kx, (N, Cin, H, W), dtype=jnp.float32)

    # kaiming_normal_ (fan_in mode, gain=sqrt(2)) on (Cout, Cin, KH, KW)
    fan_in = Cin * KH * KW
    std = (2.0 / fan_in) ** 0.5
    w = jax.random.normal(kw_key, (Cout, Cin, KH, KW), dtype=jnp.float32) * std

    # BatchNorm2d default affine params
    gamma = jnp.ones((Cout,), dtype=jnp.float32)
    beta = jnp.zeros((Cout,), dtype=jnp.float32)

    # tile_hw=128 gives grid (N=2 parallel, HW-tiles=2 arbitrary) so the
    # gridded stats-accumulation path is actually exercised at this tiny size.
    out = conv_bn(x, w, gamma, beta, tile_hw=128)
    out = jax.block_until_ready(out)

    ref = reference_conv_bn(x, w, gamma, beta)
    assert out.shape == (N, Cout, H, W)
    max_err = float(jnp.max(jnp.abs(out - ref)))
    assert jnp.allclose(out, ref, atol=1e-4, rtol=1e-4), max_err

    print("KERNEL_OK")
</pallas_src>

<mosaic_0001>
module attributes {stable_mosaic.version = 11 : i64} {
  func.func @conv_stats_kernel(%arg0: i32, %arg1: i32, %arg2: memref<8x36xf32, #tpu.memory_space<vmem>>, %arg3: memref<1x36x128xf32, #tpu.memory_space<vmem>>, %arg4: memref<1x8x128xf32, #tpu.memory_space<vmem>>, %arg5: memref<1x8x1xf32, #tpu.memory_space<vmem>>, %arg6: memref<1x8x1xf32, #tpu.memory_space<vmem>>) attributes {dimension_semantics = [#tpu.dimension_semantics<parallel>, #tpu.dimension_semantics<arbitrary>], iteration_bounds = array<i64: 2, 2>, scalar_prefetch = 0 : i64, scratch_operands = 0 : i64, tpu.core_type = #tpu.core_type<tc>, window_params = [{pipeline_mode = #tpu.pipeline_mode<synchronous>, transform_indices = @transform_0, window_bounds = array<i64: 8, 36>}, {transform_indices = @transform_1, window_bounds = array<i64: 1, 36, 128>}, {transform_indices = @transform_2, window_bounds = array<i64: 1, 8, 128>}, {transform_indices = @transform_3, window_bounds = array<i64: 1, 8, 1>}, {transform_indices = @transform_4, window_bounds = array<i64: 1, 8, 1>}]} {
    %c0 = arith.constant 0 : index
    %c0_0 = arith.constant 0 : index
    %0 = vector.load %arg2[%c0, %c0_0] : memref<8x36xf32, #tpu.memory_space<vmem>>, vector<8x36xf32>
    %c0_1 = arith.constant 0 : index
    %c0_2 = arith.constant 0 : index
    %c0_3 = arith.constant 0 : index
    %1 = vector.load %arg3[%c0_1, %c0_2, %c0_3] : memref<1x36x128xf32, #tpu.memory_space<vmem>>, vector<1x36x128xf32>
    %2 = vector.shape_cast %1 : vector<1x36x128xf32> to vector<36x128xf32>
    %cst = arith.constant dense<0.000000e+00> : vector<8x128xf32>
    %3 = tpu.matmul %0, %2, %cst {dimension_numbers = #tpu.dot_dimension_numbers<[1], [0], [0], [1], [0, 0, 1, 1], [], []>} : vector<8x36xf32>, vector<36x128xf32>, vector<8x128xf32> -> vector<8x128xf32>
    %c0_4 = arith.constant 0 : index
    %c0_5 = arith.constant 0 : index
    %c0_6 = arith.constant 0 : index
    %4 = vector.load %arg4[%c0_4, %c0_5, %c0_6] : memref<1x8x128xf32, #tpu.memory_space<vmem>>, vector<1x8x128xf32>
    %5 = vector.shape_cast %4 : vector<1x8x128xf32> to vector<8x128xf32>
    %6 = vector.shape_cast %3 : vector<8x128xf32> to vector<1x8x128xf32>
    tpu.vector_store %arg4[%c0_4, %c0_5, %c0_6], %6 {strides = array<i32>} : memref<1x8x128xf32, #tpu.memory_space<vmem>>, vector<1x8x128xf32>,
    %c0_i32 = arith.constant 0 : i32
    %7 = arith.cmpi eq, %arg1, %c0_i32 : i32
    %8 = arith.extui %7 : i1 to i32
    %c0_i32_7 = arith.constant 0 : i32
    %9 = arith.cmpi ne, %8, %c0_i32_7 : i32
    scf.if %9 {
      %cst_22 = arith.constant 0.000000e+00 : f32
      %23 = vector.broadcast %cst_22 : f32 to vector<1x8x1xf32>
      %c0_23 = arith.constant 0 : index
      %c0_24 = arith.constant 0 : index
      %c0_25 = arith.constant 0 : index
      %24 = vector.load %arg5[%c0_23, %c0_24, %c0_25] : memref<1x8x1xf32, #tpu.memory_space<vmem>>, vector<1x8x1xf32>
      tpu.vector_store %arg5[%c0_23, %c0_24, %c0_25], %23 {strides = array<i32>} : memref<1x8x1xf32, #tpu.memory_space<vmem>>, vector<1x8x1xf32>,
      %cst_26 = arith.constant 0.000000e+00 : f32
      %25 = vector.broadcast %cst_26 : f32 to vector<1x8x1xf32>
      %c0_27 = arith.constant 0 : index
      %c0_28 = arith.constant 0 : index
      %c0_29 = arith.constant 0 : index
      %26 = vector.load %arg6[%c0_27, %c0_28, %c0_29] : memref<1x8x1xf32, #tpu.memory_space<vmem>>, vector<1x8x1xf32>
      tpu.vector_store %arg6[%c0_27, %c0_28, %c0_29], %25 {strides = array<i32>} : memref<1x8x1xf32, #tpu.memory_space<vmem>>, vector<1x8x1xf32>,
    } else {
    }
    %c0_8 = arith.constant 0 : index
    %c0_9 = arith.constant 0 : index
    %c0_10 = arith.constant 0 : index
    %10 = vector.load %arg5[%c0_8, %c0_9, %c0_10] : memref<1x8x1xf32, #tpu.memory_space<vmem>>, vector<1x8x1xf32>
    %cst_11 = arith.constant dense<0.000000e+00> : vector<8xf32>
    %11 = vector.multi_reduction <add>, %3, %cst_11 [1] : vector<8x128xf32> to vector<8xf32>
    %12 = vector.shape_cast %11 : vector<8xf32> to vector<8x1xf32>
    %13 = vector.shape_cast %12 : vector<8x1xf32> to vector<1x8x1xf32>
    %14 = arith.addf %10, %13 : vector<1x8x1xf32>
    %c0_12 = arith.constant 0 : index
    %c0_13 = arith.constant 0 : index
    %c0_14 = arith.constant 0 : index
    %15 = vector.load %arg5[%c0_12, %c0_13, %c0_14] : memref<1x8x1xf32, #tpu.memory_space<vmem>>, vector<1x8x1xf32>
    tpu.vector_store %arg5[%c0_12, %c0_13, %c0_14], %14 {strides = array<i32>} : memref<1x8x1xf32, #tpu.memory_space<vmem>>, vector<1x8x1xf32>,
    %c0_15 = arith.constant 0 : index
    %c0_16 = arith.constant 0 : index
    %c0_17 = arith.constant 0 : index
    %16 = vector.load %arg6[%c0_15, %c0_16, %c0_17] : memref<1x8x1xf32, #tpu.memory_space<vmem>>, vector<1x8x1xf32>
    %17 = arith.mulf %3, %3 : vector<8x128xf32>
    %cst_18 = arith.constant dense<0.000000e+00> : vector<8xf32>
    %18 = vector.multi_reduction <add>, %17, %cst_18 [1] : vector<8x128xf32> to vector<8xf32>
    %19 = vector.shape_cast %18 : vector<8xf32> to vector<8x1xf32>
    %20 = vector.shape_cast %19 : vector<8x1xf32> to vector<1x8x1xf32>
    %21 = arith.addf %16, %20 : vector<1x8x1xf32>
    %c0_19 = arith.constant 0 : index
    %c0_20 = arith.constant 0 : index
    %c0_21 = arith.constant 0 : index
    %22 = vector.load %arg6[%c0_19, %c0_20, %c0_21] : memref<1x8x1xf32, #tpu.memory_space<vmem>>, vector<1x8x1xf32>
    tpu.vector_store %arg6[%c0_19, %c0_20, %c0_21], %21 {strides = array<i32>} : memref<1x8x1xf32, #tpu.memory_space<vmem>>, vector<1x8x1xf32>,
    return
  }
  func.func @transform_0(%arg0: i32, %arg1: i32) -> (i32, i32) {
    %c0_i32 = arith.constant 0 : i32
    %c0_i32_0 = arith.constant 0 : i32
    %c0_i32_1 = arith.constant 0 : i32
    return %c0_i32, %c0_i32_0 : i32, i32
  }
  func.func @transform_1(%arg0: i32, %arg1: i32) -> (i32, i32, i32) {
    %c0_i32 = arith.constant 0 : i32
    %c0_i32_0 = arith.constant 0 : i32
    return %arg0, %c0_i32, %arg1 : i32, i32, i32
  }
  func.func @transform_2(%arg0: i32, %arg1: i32) -> (i32, i32, i32) {
    %c0_i32 = arith.constant 0 : i32
    %c0_i32_0 = arith.constant 0 : i32
    return %arg0, %c0_i32, %arg1 : i32, i32, i32
  }
  func.func @transform_3(%arg0: i32, %arg1: i32) -> (i32, i32, i32) {
    %c0_i32 = arith.constant 0 : i32
    %c0_i32_0 = arith.constant 0 : i32
    %c0_i32_1 = arith.constant 0 : i32
    return %arg0, %c0_i32, %c0_i32_0 : i32, i32, i32
  }
  func.func @transform_4(%arg0: i32, %arg1: i32) -> (i32, i32, i32) {
    %c0_i32 = arith.constant 0 : i32
    %c0_i32_0 = arith.constant 0 : i32
    %c0_i32_1 = arith.constant 0 : i32
    return %arg0, %c0_i32, %c0_i32_0 : i32, i32, i32
  }
}

</mosaic_0001>

<llo_original>
// kernel: tpu_custom_call.1
$region0: #{tpu_custom_call.1}
  #allocation0 [shape = 'u32[]', space=smem, size = 0x4, offset = 0x4, fixed_abs, tag = 'smem constant byte address 0x4 - core index']
  #allocation1 [shape = 'u32[144,128]{1,0:T(1,128)}', space=vmem, size = 0x12000, scoped, tag = 'internal scratch']
  %s0 = inlined_call_operand.vmem [shape: f32[8,36], index: 0, kind: input, shape index: {}]
  %s1 = inlined_call_operand.vmem [shape: f32[2,36,256], index: 1, kind: input, shape index: {}]
  %s2 = inlined_call_operand.hbm [shape: f32[2,8,256], index: 2, kind: output, shape index: {0}]
  %s3 = inlined_call_operand.vmem [shape: f32[2,8,1], index: 3, kind: output, shape index: {1}]
  %s4 = inlined_call_operand.vmem [shape: f32[2,8,1], index: 4, kind: output, shape index: {2}]
  %5 = xla_tuple %s2, %s3, %s4
  %s6 = sld [smem:[#allocation0]]
  $region99: #{tpu_custom_call.1} parent=0
    _
  %s8 = ssub.s32 1, %s6
  %s9 = scalar_select 0, %s8, %s6
  $region1: #{tpu_custom_call.1} parent=0
    #allocation2 [shape = 'u8[40960]{0}', space=vmem, size = 0xa000, scoped, tag = 'input window, operand 1']
    #allocation3 [shape = 'u8[8192]{0}', space=vmem, size = 0x2000, scoped, tag = 'output window, operand 0']
    #allocation4 [shape = 's32[2]{0}', space=sflag, size = 0x8, scoped, tag = 'scoped memory for tpu_custom_call.1']
    %10 = vsyncpa [#allocation4], 0
    %s11 = scalar_lea.sflag [#allocation4], 1
    %12 = vsyncpa %s11, 0
    loop: start=0, step=1, limit=6
    $region2: #{tpu_custom_call.1} parent=1 // loop_pre_header
      _
    $region3: #{tpu_custom_call.1} parent=1 // loop_header
      %s14 = sphi 0, %s18
      %p15 = scmp.ge.s32.totalorder %s14, 6
      %s21 = sphi 0, %s33
      %s22 = sphi 0, %s29
      %s23 = sphi 0, %s21
      %s24 = sphi 0, %s22
      %s25 = sphi 0, %s23
      %s26 = sphi 0, %s24
      %s34 = sphi 0, %s34
      %s36 = sphi 0, %s34
      %s37 = sphi 0, %s36
      %s51 = sphi 0, %s37
      %s59 = sphi 0, %s61
      %s62 = sphi 0, %s59
      %s63 = sphi 0, %s62
      %s79 = sphi 0, %s63
      %s87 = sphi 0, %s89
      %s90 = sphi 0, %s87
      %s91 = sphi 0, %s90
      %s107 = sphi 0, %s91
      %s113 = sphi 0, %s115
      %s116 = sphi 0, %s113
      %s117 = sphi 0, %s116
      %s133 = sphi 0, %s117
      %s139 = sphi 0, %s141
      %s142 = sphi 0, %s139
      %s143 = sphi 0, %s142
      %s159 = sphi 0, %s143
    $region4: #{tpu_custom_call.1} parent=1 // loop_header_branch
      %17 = sbr.rel (%p15) target = $region8
    $region5: #{tpu_custom_call.1} parent=1 // loop_body
      %s19 = ssub.s32 %s14, 1
      %s20 = ssub.s32 %s14, 2
      %s27 = sadd.s32 1, %s22
      %p28 = scmp.ge.s32.totalorder %s27, 2
      %s29 = scalar_select %p28, 0, %s27
      %s30 = sadd.s32 1, %s21
      %s31 = scalar_select %p28, %s30, %s21
      %p32 = scmp.ge.s32.totalorder %s31, 2
      %s33 = scalar_select %p32, 0, %s31
      %s35 = sadd.s32 %s34, 1
      %p38 = scmp.eq.s32.totalorder %s14, 3
      %p39 = scmp.ne.s32.totalorder %s34, %s36
      %p40 = scmp.eq.s32.totalorder %s14, 0
      %p41 = por %p39, %p40
      %p42 = scmp.ne.s32.totalorder %s34, %s36
      %p43 = scmp.eq.s32.totalorder %s19, 3
      %p44 = por %p42, %p43
      %p45 = scmp.ne.s32.totalorder %s36, %s37
      %p46 = scmp.eq.s32.totalorder %s19, 0
      %p47 = por %p45, %p46
      %p48 = scmp.ne.s32.totalorder %s36, %s37
      %p49 = scmp.eq.s32.totalorder %s20, 3
      %p50 = por %p48, %p49
      %p52 = scmp.ne.s32.totalorder %s37, %s51
      %p53 = scmp.eq.s32.totalorder %s20, 0
      %p54 = por %p52, %p53
      %s55 = ssub.s32 %s21, %s33
      %s56 = ssub.s32 %s22, %s29
      %s57 = sor.u32 %s55, %s56
      %p58 = scmp.eq.s32.totalorder %s57, 0
      %s60 = sadd.s32 %s59, 1
      %s61 = scalar_select %p58, %s59, %s60
      %p64 = pneg %p58
      %p65 = scmp.eq.s32.totalorder %s14, 3
      %p66 = por %p64, %p65
      %p67 = scmp.ne.s32.totalorder %s59, %s62
      %p68 = scmp.eq.s32.totalorder %s14, 0
      %p69 = por %p67, %p68
      %p70 = scmp.ne.s32.totalorder %s59, %s62
      %p71 = scmp.eq.s32.totalorder %s19, 3
      %p72 = por %p70, %p71
      %p73 = scmp.ne.s32.totalorder %s62, %s63
      %p74 = scmp.eq.s32.totalorder %s19, 0
      %p75 = por %p73, %p74
      %p76 = scmp.ne.s32.totalorder %s62, %s63
      %p77 = scmp.eq.s32.totalorder %s20, 3
      %p78 = por %p76, %p77
      %p80 = scmp.ne.s32.totalorder %s63, %s79
      %p81 = scmp.eq.s32.totalorder %s20, 0
      %p82 = por %p80, %p81
      %s83 = ssub.s32 %s21, %s33
      %s84 = ssub.s32 %s22, %s29
      %s85 = sor.u32 %s83, %s84
      %p86 = scmp.eq.s32.totalorder %s85, 0
      %s88 = sadd.s32 %s87, 1
      %s89 = scalar_select %p86, %s87, %s88
      %p92 = pneg %p86
      %p93 = scmp.eq.s32.totalorder %s14, 3
      %p94 = por %p92, %p93
      %p95 = scmp.ne.s32.totalorder %s87, %s90
      %p96 = scmp.eq.s32.totalorder %s14, 0
      %p97 = por %p95, %p96
      %p98 = scmp.ne.s32.totalorder %s87, %s90
      %p99 = scmp.eq.s32.totalorder %s19, 3
      %p100 = por %p98, %p99
      %p101 = scmp.ne.s32.totalorder %s90, %s91
      %p102 = scmp.eq.s32.totalorder %s19, 0
      %p103 = por %p101, %p102
      %p104 = scmp.ne.s32.totalorder %s90, %s91
      %p105 = scmp.eq.s32.totalorder %s20, 3
      %p106 = por %p104, %p105
      %p108 = scmp.ne.s32.totalorder %s91, %s107
      %p109 = scmp.eq.s32.totalorder %s20, 0
      %p110 = por %p108, %p109
      %s111 = ssub.s32 %s21, %s33
      %p112 = scmp.eq.s32.totalorder %s111, 0
      %s114 = sadd.s32 %s113, 1
      %s115 = scalar_select %p112, %s113, %s114
      %p118 = pneg %p112
      %p119 = scmp.eq.s32.totalorder %s14, 3
      %p120 = por %p118, %p119
      %p121 = scmp.ne.s32.totalorder %s113, %s116
      %p122 = scmp.eq.s32.totalorder %s14, 0
      %p123 = por %p121, %p122
      %p124 = scmp.ne.s32.totalorder %s113, %s116
      %p125 = scmp.eq.s32.totalorder %s19, 3
      %p126 = por %p124, %p125
      %p127 = scmp.ne.s32.totalorder %s116, %s117
      %p128 = scmp.eq.s32.totalorder %s19, 0
      %p129 = por %p127, %p128
      %p130 = scmp.ne.s32.totalorder %s116, %s117
      %p131 = scmp.eq.s32.totalorder %s20, 3
      %p132 = por %p130, %p131
      %p134 = scmp.ne.s32.totalorder %s117, %s133
      %p135 = scmp.eq.s32.totalorder %s20, 0
      %p136 = por %p134, %p135
      %s137 = ssub.s32 %s21, %s33
      %p138 = scmp.eq.s32.totalorder %s137, 0
      %s140 = sadd.s32 %s139, 1
      %s141 = scalar_select %p138, %s139, %s140
      %p144 = pneg %p138
      %p145 = scmp.eq.s32.totalorder %s14, 3
      %p146 = por %p144, %p145
      %p147 = scmp.ne.s32.totalorder %s139, %s142
      %p148 = scmp.eq.s32.totalorder %s14, 0
      %p149 = por %p147, %p148
      %p150 = scmp.ne.s32.totalorder %s139, %s142
      %p151 = scmp.eq.s32.totalorder %s19, 3
      %p152 = por %p150, %p151
      %p153 = scmp.ne.s32.totalorder %s142, %s143
      %p154 = scmp.eq.s32.totalorder %s19, 0
      %p155 = por %p153, %p154
      %p156 = scmp.ne.s32.totalorder %s142, %s143
      %p157 = scmp.eq.s32.totalorder %s20, 3
      %p158 = por %p156, %p157
      %p160 = scmp.ne.s32.totalorder %s143, %s159
      %p161 = scmp.eq.s32.totalorder %s20, 0
      %p162 = por %p160, %p161
      %p163 = scmp.le.s32.totalorder 1, %s14
      %p164 = scmp.lt.s32.totalorder %s14, 5
      %p165 = pnand %p163, %p164
      %p166 = pneg %p165
      // Predicated region
      $region9: #{tpu_custom_call.1} parent=5 // pred_check
        _
      $region10: #{tpu_custom_call.1} parent=5 // pred_check_branch
        %168 = sbr.rel (%p165) target = $region12
      $region11: #{tpu_custom_call.1} parent=5 // pred_region
        %s169 = ssub.s32 %s14, 1
        // Predicated region
        $region13: #{tpu_custom_call.1} parent=11 // pred_check
          %p170 = pneg %p47
        $region14: #{tpu_custom_call.1} parent=11 // pred_check_branch
          %172 = sbr.rel (%p170) target = $region16
        $region15: #{tpu_custom_call.1} parent=11 // pred_region
          _
        $region16: #{tpu_custom_call.1} parent=11 // pred_fallthru
          _
      $region12: #{tpu_custom_call.1} parent=5 // pred_fallthru
        _
      %p173 = scmp.lt.s32.totalorder %s14, 4
      // Predicated region
      $region17: #{tpu_custom_call.1} parent=5 // pred_check
        %p174 = pneg %p173
      $region18: #{tpu_custom_call.1} parent=5 // pred_check_branch
        %176 = sbr.rel (%p174) target = $region20
      $region19: #{tpu_custom_call.1} parent=5 // pred_region
        // Predicated region
        $region21: #{tpu_custom_call.1} parent=19 // pred_check
          %p177 = pneg %p69
        $region22: #{tpu_custom_call.1} parent=19 // pred_check_branch
          %179 = sbr.rel (%p177) target = $region24
        $region23: #{tpu_custom_call.1} parent=19 // pred_region
          %s180 = sand.u32 %s59, 1
          %s181 = sand.u32 %s59, 1
          %s182 = smul.addr %s181, 40
          %s183 = scalar_lea.vmem [#allocation2], %s182
          %s184 = smul.addr %s21, 10
          %s185 = sadd.s32 %s22, %s184
          %s186 = smul.addr %s185, 8
          %s187 = scalar_lea.vmem %s1, %s186
          // Predicated region
          $region25: #{tpu_custom_call.1} parent=23 // pred_check
            _
          $region26: #{tpu_custom_call.1} parent=23 // pred_check_branch
            %189 = sbr.rel (0) target = $region28
          $region27: #{tpu_custom_call.1} parent=23 // pred_region
            // Predicated region
            $region29: #{tpu_custom_call.1} parent=27 // pred_check
              _
            $region30: #{tpu_custom_call.1} parent=27 // pred_check_branch
              %191 = sbr.rel (0) target = $region32
            $region31: #{tpu_custom_call.1} parent=27 // pred_region
              // Predicated region
              $region44: #{tpu_custom_call.1} parent=31 // pred_check
                _
              $region45: #{tpu_custom_call.1} parent=31 // pred_check_branch
                %214 = sbr.rel (0) target = $region47
              $region46: #{tpu_custom_call.1} parent=31 // pred_region
                loop: start=0, step=1, limit=1
                $region48: #{tpu_custom_call.1} parent=46 // loop_pre_header
                  _
                $region49: #{tpu_custom_call.1} parent=46 // loop_header
                  %s216 = sphi 0, %s220
                  %p217 = scmp.ge.s32.totalorder %s216, 1
                  %s221 = sphi %s187, %s187
                  %s222 = sphi %s183, %s183
                $region50: #{tpu_custom_call.1} parent=46 // loop_header_branch
                  %219 = sbr.rel (%p217) target = $region54
                $region51: #{tpu_custom_call.1} parent=46 // loop_body
                  %v223 = vld [vmem:[%s221] sm:$0xff]
                  %224 = vst [vmem:[%s222] sm:$0xff] %v223
                  %v225 = vld [vmem:[%s221 + $0x10] sm:$0xff]
                  %226 = vst [vmem:[%s222 + $0x8] sm:$0xff] %v225
                  %v227 = vld [vmem:[%s221 + $0x20] sm:$0xff]
                  %228 = vst [vmem:[%s222 + $0x10] sm:$0xff] %v227
                  %v229 = vld [vmem:[%s221 + $0x30] sm:$0xff]
                  %230 = vst [vmem:[%s222 + $0x18] sm:$0xff] %v229
                  %v231 = vld [vmem:[%s221 + $0x40] sm:$0xff]
                  %232 = vst [vmem:[%s222 + $0x20] sm:$0xff] %v231
                $region52: #{tpu_custom_call.1} parent=46 // loop_footer
                  %s220 = sadd.s32 1, %s216
                $region53: #{tpu_custom_call.1} parent=46 // loop_footer_branch
                  %215 = sbr.rel target = $region49
                $region54: #{tpu_custom_call.1} parent=46 // loop_exit
                  _
              $region47: #{tpu_custom_call.1} parent=31 // pred_fallthru
                _
              // Predicated region
              $region55: #{tpu_custom_call.1} parent=31 // pred_check
                _
              $region56: #{tpu_custom_call.1} parent=31 // pred_check_branch
                %234 = sbr.rel target = $region58
              $region57: #{tpu_custom_call.1} parent=31 // pred_region
                _
              $region58: #{tpu_custom_call.1} parent=31 // pred_fallthru
                _
            $region32: #{tpu_custom_call.1} parent=27 // pred_fallthru
              _
            // Predicated region
            $region33: #{tpu_custom_call.1} parent=27 // pred_check
              _
            $region34: #{tpu_custom_call.1} parent=27 // pred_check_branch
              %193 = sbr.rel target = $region36
            $region35: #{tpu_custom_call.1} parent=27 // pred_region
              loop: start=0, step=1, limit=1
              $region37: #{tpu_custom_call.1} parent=35 // loop_pre_header
                _
              $region38: #{tpu_custom_call.1} parent=35 // loop_header
                %s196 = sphi 0, %s200
                %p197 = scmp.ge.s32.totalorder %s196, 1
                %s201 = sphi %s187, %s187
                %s202 = sphi %s183, %s183
              $region39: #{tpu_custom_call.1} parent=35 // loop_header_branch
                %199 = sbr.rel (%p197) target = $region43
              $region40: #{tpu_custom_call.1} parent=35 // loop_body
                %v203 = vld [vmem:[%s201] sm:$0xff]
                %204 = vst [vmem:[%s202] sm:$0xff] %v203
                %v205 = vld [vmem:[%s201 + $0x10] sm:$0xff]
                %206 = vst [vmem:[%s202 + $0x8] sm:$0xff] %v205
                %v207 = vld [vmem:[%s201 + $0x20] sm:$0xff]
                %208 = vst [vmem:[%s202 + $0x10] sm:$0xff] %v207
                %v209 = vld [vmem:[%s201 + $0x30] sm:$0xff]
                %210 = vst [vmem:[%s202 + $0x18] sm:$0xff] %v209
                %v211 = vld [vmem:[%s201 + $0x40] sm:$0xff]
                %212 = vst [vmem:[%s202 + $0x20] sm:$0xff] %v211
              $region41: #{tpu_custom_call.1} parent=35 // loop_footer
                %s200 = sadd.s32 1, %s196
              $region42: #{tpu_custom_call.1} parent=35 // loop_footer_branch
                %195 = sbr.rel target = $region38
              $region43: #{tpu_custom_call.1} parent=35 // loop_exit
                _
            $region36: #{tpu_custom_call.1} parent=27 // pred_fallthru
              _
          $region28: #{tpu_custom_call.1} parent=23 // pred_fallthru
            _
          %235 = vnop
        $region24: #{tpu_custom_call.1} parent=19 // pred_fallthru
          _
      $region20: #{tpu_custom_call.1} parent=5 // pred_fallthru
        _
      %p236 = scmp.le.s32.totalorder 1, %s14
      %p237 = scmp.lt.s32.totalorder %s14, 5
      %p238 = pnand %p236, %p237
      %p239 = pneg %p238
      // Predicated region
      $region59: #{tpu_custom_call.1} parent=5 // pred_check
        _
      $region60: #{tpu_custom_call.1} parent=5 // pred_check_branch
        %241 = sbr.rel (%p238) target = $region62
      $region61: #{tpu_custom_call.1} parent=5 // pred_region
        %s242 = ssub.s32 %s14, 1
        %s243 = sand.u32 %s62, 1
        %s244 = sand.u32 %s62, 1
        %s245 = smul.addr %s244, 40
        %s246 = scalar_lea.vmem [#allocation2], %s245
        // Predicated region
        $region63: #{tpu_custom_call.1} parent=61 // pred_check
          %p247 = pneg %p75
        $region64: #{tpu_custom_call.1} parent=61 // pred_check_branch
          %249 = sbr.rel (%p247) target = $region66
        $region65: #{tpu_custom_call.1} parent=61 // pred_region
          _
        $region66: #{tpu_custom_call.1} parent=61 // pred_fallthru
          _
        %p250 = pneg %p47
        %p251 = pneg %p44
        %s252 = sand.u32 %s62, 1
        %s253 = sand.u32 %s62, 1
        %s254 = smul.addr %s253, 40
        %s255 = scalar_lea.vmem [#allocation2], %s254
        %p256 = pneg %p75
        %p257 = pneg %p72
        %p258 = pneg %p103
        %p259 = pneg %p100
        %s260 = sand.u32 %s90, 1
        %s261 = scalar_lea.sflag [#allocation4], %s260
        %s262 = sand.u32 %s90, 1
        %s263 = smul.addr %s262, 8
        %s264 = scalar_lea.vmem [#allocation3], %s263
        %p265 = pneg %p129
        %p266 = pneg %p126
        %p267 = scmp.lt.s32.totalorder %s23, 1
        %s268 = scalar_select %p267, %s23, 1
        %s269 = smul.addr %s268, 8
        %s270 = scalar_lea.vmem %s3, %s269
        %p271 = pneg %p155
        %p272 = pneg %p152
        %p273 = scmp.lt.s32.totalorder %s23, 1
        %s274 = scalar_select %p273, %s23, 1
        %s275 = smul.addr %s274, 8
        %s276 = scalar_lea.vmem %s4, %s275
        %p277 = scmp.lt.s32.totalorder %s23, 1
        %s278 = scalar_select %p277, %s23, 1
        %s279 = smul.addr %s278, 8
        %s280 = scalar_lea.vmem %s3, %s279
        %p281 = scmp.lt.s32.totalorder %s23, 1
        %s282 = scalar_select %p281, %s23, 1
        %s283 = smul.addr %s282, 8
        %s284 = scalar_lea.vmem %s4, %s283
        %v285 = vld [vmem:[%s0] sm:$0xff]
        %v286 = vld [vmem:[%s246] sm:$0xff]
        %v287 = vld [vmem:[%s246 + $0x8] sm:$0xff]
        %v288 = vld [vmem:[%s246 + $0x10] sm:$0xff]
        %v289 = vld [vmem:[%s246 + $0x18] sm:$0xff]
        %v290 = vld [vmem:[%s246 + $0x20] sm:$0xf]
        %vm291 = vcmask 293888
        %v293 = vsel %vm291, %v285, 0
        %vm295 = vcmask 1043456
        %v297 = vsel %vm295, %v290, 0
        %299 = vmatprep.subr.mxu0 0.0
        %300 = vmatpush1.msra.mxu0 %v286
        %301 = vmatprep.subr.mxu0 0.0
        %302 = vmatpush1.msra.mxu0 %v287
        %303 = vmatprep.subr.mxu0 0.0
        %304 = vmatpush1.msra.mxu0 %v288
        %305 = vmatprep.subr.mxu0 0.0
        %306 = vmatpush1.msra.mxu0 %v289
        %307 = vmatprep.subr.mxu0 0.0
        %308 = vmatpush1.msra.mxu0 %v297
        %309 = vmatprep.subr.mxu0 0.0
        %310 = vmatpush1.msra.mxu0 0.0
        %311 = vmatprep.subr.mxu0 0.0
        %312 = vmatpush1.msra.mxu0 0.0
        %313 = vmatprep.subr.mxu0 0.0
        %314 = vmatpush1.msra.mxu0 0.0
        %315 = vmatprep.subr.mxu0 0.0
        %316 = vmatpush1.msra.mxu0 0.0
        %317 = vmatprep.subr.mxu0 0.0
        %318 = vmatpush1.msra.mxu0 0.0
        %319 = vmatprep.subr.mxu0 0.0
        %320 = vmatpush1.msra.mxu0 0.0
        %321 = vmatprep.subr.mxu0 0.0
        %322 = vmatpush1.msra.mxu0 0.0
        %323 = vmatprep.subr.mxu0 0.0
        %324 = vmatpush1.msra.mxu0 0.0
        %325 = vmatprep.subr.mxu0 0.0
        %326 = vmatpush1.msra.mxu0 0.0
        %327 = vmatprep.subr.mxu0 0.0
        %328 = vmatpush1.msra.mxu0 0.0
        %329 = vmatprep.subr.mxu0 0.0
        %330 = vmatpush1.msra.mxu0 0.0
        %331 = vmatprep.subr.mxu0 0.0
        %332 = vmatpush1.msra.mxu0 0.0
        %333 = vmatprep.subr.mxu0 0.0
        %334 = vmatpush1.msra.mxu0 0.0
        %335 = vmatprep.subr.mxu0 0.0
        %336 = vmatpush1.msra.mxu0 0.0
        %337 = vmatprep.subr.mxu0 0.0
        %338 = vmatpush1.msra.mxu0 0.0
        %339 = vmatprep.subr.mxu0 0.0
        %340 = vmatpush1.msra.mxu0 0.0
        %341 = vmatprep.subr.mxu0 0.0
        %342 = vmatpush1.msra.mxu0 0.0
        %343 = vmatprep.subr.mxu0 0.0
        %344 = vmatpush1.msra.mxu0 0.0
        %345 = vmatprep.subr.mxu0 0.0
        %346 = vmatpush1.msra.mxu0 0.0
        %347 = vmatprep.subr.mxu0 0.0
        %348 = vmatpush1.msra.mxu0 0.0
        %349 = vmatprep.subr.mxu0 0.0
        %350 = vmatpush1.msra.mxu0 0.0
        %351 = vmatprep.subr.mxu0 0.0
        %352 = vmatpush1.msra.mxu0 0.0
        %353 = vmatprep.subr.mxu0 0.0
        %354 = vmatpush1.msra.mxu0 0.0
        %355 = vmatprep.subr.mxu0 0.0
        %356 = vmatpush1.msra.mxu0 0.0
        %357 = vmatprep.subr.mxu0 0.0
        %358 = vmatpush1.msra.mxu0 0.0
        %359 = vmatprep.subr.mxu0 0.0
        %360 = vmatpush1.msra.mxu0 0.0
        %361 = vmatprep.subr.mxu0 0.0
        %362 = vmatpush1.msra.mxu0 0.0
        %363 = vmatprep.mubr.f32.mxu0 0.0
        %364 = vmatmul.mubr.f32.gmra.mrb[0].mxu0 %v293
        %v365 = vpop.f32.mrb[0].mxu0
        %v366 = vadd.f32 0.0, %v365
        %v367 = vpop.f32.mrb[0].mxu0
        %368 = vdwg.mxu0
        %369 = vst [vmem:[%s264] sm:$0xff] %v366
        %p370 = scmp.eq.s32.totalorder %s24, 0
        // Predicated region
        $region67: #{tpu_custom_call.1} parent=61 // pred_check
          %p371 = pneg %p370
        $region68: #{tpu_custom_call.1} parent=61 // pred_check_branch
          %373 = sbr.rel (%p371) target = $region70
        $region69: #{tpu_custom_call.1} parent=61 // pred_region
          %vm374 = vcmask 7168
          %375 = vst.msk [vmem:[%s280] sm:$0xff] %vm374, 0.0
          %376 = vst.msk [vmem:[%s284] sm:$0xff] %vm374, 0.0
        $region70: #{tpu_custom_call.1} parent=61 // pred_fallthru
          _
        %v377 = vld [vmem:[%s280] sm:$0xff]
        %378 = vadd.xlane.f32.xlu0 %v366
        %v379 = vpop.xlane.xlu0 %378
        %v380 = vadd.f32 %v377, %v379
        %vm381 = vcmask 7168
        %382 = vst.msk [vmem:[%s280] sm:$0xff] %vm381, %v380
        %v383 = vld [vmem:[%s284] sm:$0xff]
        %v384 = vmul.f32 %v366, %v366
        %385 = vadd.xlane.f32.xlu0 %v384
        %v386 = vpop.xlane.xlu0 %385
        %v387 = vadd.f32 %v383, %v386
        %388 = vst.msk [vmem:[%s284] sm:$0xff] %vm381, %v387
        %s389 = sand.u32 %s90, 1
        %s390 = scalar_lea.sflag [#allocation4], %s389
        %s391 = sand.u32 %s90, 1
        %s392 = smul.addr %s391, 8
        %s393 = scalar_lea.vmem [#allocation3], %s392
        %p394 = scmp.lt.s32.totalorder %s23, 1
        %s395 = scalar_select %p394, %s23, 1
        %s396 = smul.addr %s395, 8
        %s397 = scalar_lea.vmem %s3, %s396
        %p398 = scmp.lt.s32.totalorder %s23, 1
        %s399 = scalar_select %p398, %s23, 1
        %s400 = smul.addr %s399, 8
        %s401 = scalar_lea.vmem %s4, %s400
        // Predicated region
        $region71: #{tpu_custom_call.1} parent=61 // pred_check
          %p402 = pneg %p100
        $region72: #{tpu_custom_call.1} parent=61 // pred_check_branch
          %404 = sbr.rel (%p402) target = $region74
        $region73: #{tpu_custom_call.1} parent=61 // pred_region
          %s406 = ssub.s32 128, 128
          %407 = vsyncadd %s390, %s406
          %s408 = smul.addr %s23, 2
          %s409 = sadd.s32 %s24, %s408
          %s410 = smul.addr %s409, 128
          %s411 = scalar_lea.hbm %s2, %s410
          %s413 = sshll.u32 %s393, 4
          %s414 = int_to_ptr.vmem [resolvable:$true] %s413
          %416 = dma.vmem_to_hbm [thread:$0]  %s414, 128, %s411, %s390
        $region74: #{tpu_custom_call.1} parent=61 // pred_fallthru
          _
        // Predicated region
        $region75: #{tpu_custom_call.1} parent=61 // pred_check
          %p417 = pneg %p126
        $region76: #{tpu_custom_call.1} parent=61 // pred_check_branch
          %419 = sbr.rel (%p417) target = $region78
        $region77: #{tpu_custom_call.1} parent=61 // pred_region
          _
        $region78: #{tpu_custom_call.1} parent=61 // pred_fallthru
          _
        // Predicated region
        $region79: #{tpu_custom_call.1} parent=61 // pred_check
          %p420 = pneg %p152
        $region80: #{tpu_custom_call.1} parent=61 // pred_check_branch
          %422 = sbr.rel (%p420) target = $region82
        $region81: #{tpu_custom_call.1} parent=61 // pred_region
          _
        $region82: #{tpu_custom_call.1} parent=61 // pred_fallthru
          _
      $region62: #{tpu_custom_call.1} parent=5 // pred_fallthru
        _
      %p423 = scmp.le.s32.totalorder 2, %s14
      // Predicated region
      $region83: #{tpu_custom_call.1} parent=5 // pred_check
        %p424 = pneg %p423
      $region84: #{tpu_custom_call.1} parent=5 // pred_check_branch
        %426 = sbr.rel (%p424) target = $region86
      $region85: #{tpu_custom_call.1} parent=5 // pred_region
        %s427 = ssub.s32 %s14, 2
        // Predicated region
        $region87: #{tpu_custom_call.1} parent=85 // pred_check
          %p428 = pneg %p106
        $region88: #{tpu_custom_call.1} parent=85 // pred_check_branch
          %430 = sbr.rel (%p428) target = $region90
        $region89: #{tpu_custom_call.1} parent=85 // pred_region
          %s431 = sand.u32 %s91, 1
          %s432 = scalar_lea.sflag [#allocation4], %s431
          %s433 = sand.u32 %s91, 1
          %s434 = smul.addr %s433, 8
          %s435 = scalar_lea.vmem [#allocation3], %s434
          %436 = dma.done %s432, 128
        $region90: #{tpu_custom_call.1} parent=85 // pred_fallthru
          _
        // Predicated region
        $region91: #{tpu_custom_call.1} parent=85 // pred_check
          %p437 = pneg %p132
        $region92: #{tpu_custom_call.1} parent=85 // pred_check_branch
          %439 = sbr.rel (%p437) target = $region94
        $region93: #{tpu_custom_call.1} parent=85 // pred_region
          %p440 = scmp.lt.s32.totalorder %s25, 1
          %s441 = scalar_select %p440, %s25, 1
          %s442 = smul.addr %s441, 8
          %s443 = scalar_lea.vmem %s3, %s442
        $region94: #{tpu_custom_call.1} parent=85 // pred_fallthru
          _
        // Predicated region
        $region95: #{tpu_custom_call.1} parent=85 // pred_check
          %p444 = pneg %p158
        $region96: #{tpu_custom_call.1} parent=85 // pred_check_branch
          %446 = sbr.rel (%p444) target = $region98
        $region97: #{tpu_custom_call.1} parent=85 // pred_region
          %p447 = scmp.lt.s32.totalorder %s25, 1
          %s448 = scalar_select %p447, %s25, 1
          %s449 = smul.addr %s448, 8
          %s450 = scalar_lea.vmem %s4, %s449
        $region98: #{tpu_custom_call.1} parent=85 // pred_fallthru
          _
      $region86: #{tpu_custom_call.1} parent=5 // pred_fallthru
        _
    $region6: #{tpu_custom_call.1} parent=1 // loop_footer
      %s18 = sadd.s32 1, %s14
    $region7: #{tpu_custom_call.1} parent=1 // loop_footer_branch
      %13 = sbr.rel target = $region3
    $region8: #{tpu_custom_call.1} parent=1 // loop_exit
      _
    %451 = vsyncpa [#allocation4], 1
    %s452 = scalar_lea.sflag [#allocation4], 1
    %453 = vsyncpa %s452, 1

</llo_original>
